<compile_context>
chip_gen: v7x
topology: tpu7x:2x2x1
jax: 0.10.0
libtpu: 0.0.40
codegen_flags: <defaults>
</compile_context>

<pallas_src>
import functools
import math

import jax
import jax.numpy as jnp
from jax.experimental import pallas as pl
from jax.experimental.pallas import tpu as pltpu


def _round_up(x, m):
    return (x + m - 1) // m * m


def _vmem_capacity_bytes():
    """Best-effort per-TensorCore VMEM capacity (bytes)."""
    try:
        info = pltpu.get_tpu_info()
        cap = int(getattr(info, "vmem_capacity_bytes", 0) or 0)
        if cap > 0:
            return cap
    except Exception:
        pass
    try:
        kind = (getattr(jax.devices()[0], "device_kind", "") or "").lower()
        if "7" in kind:          # v7x: 64 MiB per TensorCore
            return 64 * (1 << 20)
    except Exception:
        pass
    return 128 * (1 << 20)       # v5e / v6e


def _multi_tensorcore_device():
    """True on chips with >1 TensorCore per device (v4 / v5p / v7x)."""
    try:
        info = pltpu.get_tpu_info()
        for attr in ("num_cores", "core_count", "cores_per_chip", "num_tensorcores"):
            v = getattr(info, attr, None)
            if isinstance(v, int) and 0 < v <= 8:
                return v >= 2
    except Exception:
        pass
    try:
        kind = (getattr(jax.devices()[0], "device_kind", "") or "").lower()
        if ("v4" in kind) or ("v5p" in kind) or ("7" in kind):
            return True
    except Exception:
        pass
    return False


def _ada_loss_kernel(pred_ref, target_ref, actions_ref,
                     cls_out_ref, act_out_ref,
                     cls_acc, act_acc,
                     *, n_valid, classes, smoothing, tile_rows, tiles_per_core):
    p = pl.program_id(0)          # parallel (core) axis
    t = pl.program_id(1)          # row-tile axis (reduction / "arbitrary")

    @pl.when(t == 0)
    def _init():
        cls_acc[...] = jnp.zeros_like(cls_acc)
        act_acc[...] = jnp.zeros_like(act_acc)

    # -------- Label-smoothing CE, logp-free form (smoothing weights sum to 1) --------
    pred = pred_ref[...].astype(jnp.float32)                       # (TN, C)
    tn, c = pred.shape
    row_max = jnp.max(pred, axis=-1, keepdims=True)                # (TN, 1)
    lse = jnp.log(jnp.sum(jnp.exp(pred - row_max), axis=-1, keepdims=True))

    confidence = 1.0 - smoothing
    smooth_val = smoothing / max(classes - 1, 1)
    class_ids = jax.lax.broadcasted_iota(jnp.int32, (tn, c), 1)
    # target comes in lane-dense (1, TN); one cheap XLU transpose -> (TN, 1)
    tgt_col = jnp.transpose(target_ref[...].astype(jnp.int32))
    weights = jnp.where(class_ids == tgt_col,
                        jnp.float32(confidence), jnp.float32(smooth_val))
    wsum = jnp.sum(pred * weights, axis=-1, keepdims=True)         # (TN, 1)
    row_loss = (row_max + lse) - wsum                              # (TN, 1)

    row0 = (p * tiles_per_core + t) * tile_rows

    @pl.when(row0 + tile_rows <= n_valid)
    def _full_tile():                                              # no padding here
        cls_acc[...] += jnp.sum(row_loss)

    @pl.when(row0 + tile_rows > n_valid)
    def _boundary_tile():                                          # mask padded rows
        row_ids = row0 + jax.lax.broadcasted_iota(jnp.int32, (tn, 1), 0)
        cls_acc[...] += jnp.sum(jnp.where(row_ids < n_valid, row_loss, 0.0))

    # -------- Actions: raw per-action sums over (K, N); /K and /N in the wrapper -----
    # padded batch columns are zero (wrapper jnp.pad), so they contribute nothing.
    acts = actions_ref[...].astype(jnp.float32)                    # (A, K, TN)
    per_an = jnp.sum(acts, axis=1)                                 # (A, TN) sublane reduce
    act_acc[...] += jnp.sum(per_an, axis=1, keepdims=True)         # (A, 1)  lane reduce

    @pl.when(t == pl.num_programs(1) - 1)
    def _finalize():
        cls_out_ref[0] = cls_acc[...]
        act_out_ref[0] = act_acc[...]


def _ada_loss_sums(pred, target, actions_lane_dense, *, classes, smoothing,
                   tile_rows=None):
    """Runs the Pallas kernel; returns (cls_sum, act_sum).

    cls_sum : scalar f32, sum over rows of label-smoothed CE.
    act_sum : (A,) f32, per-action raw sum over (K, N) of the actions tensor.
    """
    n, c = pred.shape
    a, k, _ = actions_lane_dense.shape

    capacity = _vmem_capacity_bytes()
    auto_tile = tile_rows is None

    # ---- row-tile selection: ~35% of per-TC VMEM for blocks + f32 temporaries ----
    if auto_tile:
        budget = int(0.35 * capacity)
        c_pad = _round_up(c, 128)
        k_pad = _round_up(k, 8)
        bytes_per_row = (2 * c_pad * pred.dtype.itemsize                     # pred blocks (dbl-buf)
                         + 3 * c_pad * 4                                     # f32 CE temporaries
                         + 2 * a * k_pad * actions_lane_dense.dtype.itemsize  # action blocks
                         + a * k_pad * 4                                     # f32 actions temp
                         + 64)                                               # lane-dense target
        max_rows = max(128, budget // max(bytes_per_row, 1))
        if _round_up(n, 8) <= min(max_rows, 4096):
            tile_rows = _round_up(n, 8)            # single tile, full extent
        else:
            tile_rows = max(128, min(2048, (max_rows // 128) * 128))

    num_tiles = -(-n // tile_rows)

    # ---- parallel split: only on multi-TC chips, and never via phantom pad tiles ----
    n_par = 1
    if num_tiles >= 2 and _multi_tensorcore_device():
        if num_tiles % 2 == 1 and auto_tile:
            tr2 = max(128, _round_up(-(-n // (num_tiles + 1)), 128))
            nt2 = -(-n // tr2)
            if nt2 % 2 == 0:
                tile_rows, num_tiles = tr2, nt2
        if num_tiles % 2 == 0:
            n_par = 2
    tiles_per_core = -(-num_tiles // n_par)
    num_tiles = n_par * tiles_per_core
    n_pad = num_tiles * tile_rows

    if num_tiles > 1:
        # actions / target have N on the lane axis -> multi-tile needs 128-multiple tiles
        assert tile_rows % 128 == 0, "tile_rows must be a multiple of 128 when tiling N"

    # ---- pad batch axis (native dtype preserved; no upcasting here) ----
    pred_p = pred if n_pad == n else jnp.pad(pred, ((0, n_pad - n), (0, 0)))
    tgt2 = target.astype(jnp.int32).reshape(1, n)                       # lane-dense
    tgt_p = tgt2 if n_pad == n else jnp.pad(tgt2, ((0, 0), (0, n_pad - n)))
    acts_p = (actions_lane_dense if n_pad == n else
              jnp.pad(actions_lane_dense, ((0, 0), (0, 0), (0, n_pad - n))))

    grid = (n_par, tiles_per_core)
    in_specs = [
        pl.BlockSpec((tile_rows, c), lambda p, t: (p * tiles_per_core + t, 0)),
        pl.BlockSpec((1, tile_rows), lambda p, t: (0, p * tiles_per_core + t)),
        pl.BlockSpec((a, k, tile_rows), lambda p, t: (0, 0, p * tiles_per_core + t)),
    ]
    out_specs = (
        pl.BlockSpec((1, 1, 1), lambda p, t: (p, 0, 0)),
        pl.BlockSpec((1, a, 1), lambda p, t: (p, 0, 0)),
    )
    out_shape = (
        jax.ShapeDtypeStruct((n_par, 1, 1), jnp.float32),
        jax.ShapeDtypeStruct((n_par, a, 1), jnp.float32),
    )
    scratch_shapes = [
        pltpu.VMEM((1, 1), jnp.float32),
        pltpu.VMEM((a, 1), jnp.float32),
    ]

    # ---- VMEM budget (double-buffered blocks + f32 temporaries), capped at ~85% of
    #      the chip's per-TC capacity so Mosaic keeps scheduling headroom (v7x 64 MiB).
    c_pad = _round_up(c, 128)
    k_pad = _round_up(k, 8)
    vmem_est = (2 * tile_rows * c_pad * pred_p.dtype.itemsize            # pred blocks
                + 4 * tile_rows * c_pad * 4                              # f32 CE temporaries
                + 2 * a * k_pad * tile_rows * acts_p.dtype.itemsize      # action blocks
                + a * k_pad * tile_rows * 4                              # f32 actions temp
                + 2 * 8 * tile_rows * 4                                  # target blocks
                + (1 << 20))                                             # misc / outputs
    vmem_limit = int(min(0.85 * capacity, max(vmem_est * 1.25, 24 * (1 << 20))))

    cost = pl.CostEstimate(
        flops=int(7 * n_pad * c + 2 * a * k * n_pad),
        transcendentals=int(n_pad * (c + 1)),
        bytes_accessed=int(pred_p.size * pred_p.dtype.itemsize
                           + tgt_p.size * tgt_p.dtype.itemsize
                           + acts_p.size * acts_p.dtype.itemsize),
    )

    kernel = functools.partial(
        _ada_loss_kernel,
        n_valid=int(n),
        classes=int(classes),
        smoothing=float(smoothing),
        tile_rows=int(tile_rows),
        tiles_per_core=int(tiles_per_core),
    )

    cls_part, act_part = pl.pallas_call(
        kernel,
        out_shape=out_shape,
        grid_spec=pltpu.PrefetchScalarGridSpec(
            num_scalar_prefetch=0,
            grid=grid,
            in_specs=in_specs,
            out_specs=out_specs,
            scratch_shapes=scratch_shapes,
        ),
        compiler_params=pltpu.CompilerParams(
            dimension_semantics=("parallel", "arbitrary"),
            vmem_limit_bytes=vmem_limit,
        ),
        cost_estimate=cost,
    )(pred_p, tgt_p, acts_p)

    cls_sum = jnp.sum(cls_part)
    act_sum = jnp.sum(act_part, axis=(0, 2))     # (A,) raw sum over (K, N)
    return cls_sum, act_sum


class AdaLossPallas:
    def __init__(self, classes, alpha=1.0, label_smoothing_num=0.0, dim=-1,
                 freeze_alpha=0, warm_epoch=0, beta=0.0, begin_action=1):
        self.classes = classes
        self.alpha = alpha
        self.smoothing = label_smoothing_num
        self.dim = dim
        self.freeze_alpha = freeze_alpha
        self.warm_epoch = warm_epoch
        self.beta = beta
        self.begin_action = begin_action

    def __call__(self, pred, target, flops_vector, actions, epoch, tile_rows=None):
        # epoch / alpha warm-up schedule: Python scalar glue, applied OUTSIDE the
        # kernel so changing alpha per epoch never recompiles the Mosaic kernel.
        if epoch < self.freeze_alpha:
            alpha = 0.0
        else:
            ratio = min(epoch / self.warm_epoch, 1.0) if self.warm_epoch != 0 else 1.0
            alpha = self.alpha * ratio

        a = actions.shape[0]
        n = actions.shape[1]
        k = math.prod(actions.shape[2:])
        # lane-dense layout: (A, K, N) so batch N lives on the 128-lane axis
        actions_ld = jnp.swapaxes(actions.reshape(a, n, k), 1, 2)

        cls_sum, act_sum = _ada_loss_sums(
            pred, target, actions_ld,
            classes=self.classes, smoothing=self.smoothing, tile_rows=tile_rows)

        n_f = jnp.float32(n)
        ls_cls = cls_sum / n_f

        # /K normalization moved out of the kernel.
        act_mean_k = act_sum / jnp.float32(k)            # (A,) sum over N of K-means

        ba = self.begin_action
        flops = flops_vector.astype(jnp.float32)
        ls_flops = (jnp.sum(act_mean_k[ba:] * flops[ba:]) / (n_f * jnp.float32(a - ba))
                    ) * jnp.float32(alpha)

        avg_action = act_mean_k / n_f
        centered = avg_action - jnp.mean(avg_action)
        ls_uniform = jnp.sqrt(jnp.sum(centered * centered)) * jnp.float32(self.beta)
        return ls_flops, ls_cls, ls_uniform


def _reference(pred, target, flops_vector, actions, epoch, *, classes, alpha,
               smoothing, freeze_alpha, warm_epoch, beta, begin_action):
    # Pure-JAX reference (mirrors the PyTorch module), computed in f32.
    if epoch < freeze_alpha:
        a = 0.0
    else:
        ratio = min(epoch / warm_epoch, 1.0) if warm_epoch != 0 else 1.0
        a = alpha * ratio
    pred = pred.astype(jnp.float32)
    actions = actions.astype(jnp.float32)
    flops_vector = flops_vector.astype(jnp.float32)

    logp = jax.nn.log_softmax(pred, axis=-1)
    confidence = 1.0 - smoothing
    true_dist = jnp.full_like(logp, smoothing / (classes - 1))
    true_dist = true_dist.at[jnp.arange(pred.shape[0]), target].set(confidence)
    ls_cls = jnp.mean(jnp.sum(-true_dist * logp, axis=-1))

    per_an = jnp.mean(actions[begin_action:], axis=(2, 3, 4, 5))         # (A-ba, N)
    ls_flops = jnp.mean(per_an.T * flops_vector[begin_action:][None, :]) * a

    avg_action = jnp.mean(actions, axis=(1, 2, 3, 4, 5))
    ls_uniform = jnp.linalg.norm(avg_action - avg_action.mean(), ord=2) * beta
    return ls_flops, ls_cls, ls_uniform


if __name__ == "__main__":
    # ---------------- test 1: small shapes (single tile, single parallel slice) ----
    k1, k2, k3, k4 = jax.random.split(jax.random.PRNGKey(0), 4)
    N, C = 8, 16               # batch, classes
    A, M, T = 4, 2, 4          # num actions, M, T (spatial dims are 1x1)

    pred = jax.random.normal(k1, (N, C), dtype=jnp.float32)
    target = jax.random.randint(k2, (N,), 0, C, dtype=jnp.int32)
    flops_vector = jax.random.uniform(k3, (A,), dtype=jnp.float32)
    actions = jax.random.uniform(k4, (A, N, M, 1, 1, T), dtype=jnp.float32)
    epoch = 3

    loss = AdaLossPallas(classes=C, alpha=1.0, label_smoothing_num=0.1,
                         freeze_alpha=0, warm_epoch=5, beta=0.5, begin_action=1)
    out = loss(pred, target, flops_vector, actions, epoch)
    jax.block_until_ready(out)
    ref = _reference(pred, target, flops_vector, actions, epoch,
                     classes=C, alpha=1.0, smoothing=0.1, freeze_alpha=0,
                     warm_epoch=5, beta=0.5, begin_action=1)
    for got, want in zip(out, ref):
        assert jnp.allclose(got, want, atol=1e-5, rtol=1e-5), (got, want)

    # ---------------- test 2: tiled path (grid > 1, batch padding, bf16 pred) -------
    k5, k6, k7, k8 = jax.random.split(jax.random.PRNGKey(1), 4)
    N2, C2 = 300, 37
    A2, M2, T2 = 5, 3, 2
    pred2 = jax.random.normal(k5, (N2, C2), dtype=jnp.float32).astype(jnp.bfloat16)
    target2 = jax.random.randint(k6, (N2,), 0, C2, dtype=jnp.int32)
    flops2 = jax.random.uniform(k7, (A2,), dtype=jnp.float32)
    actions2 = jax.random.uniform(k8, (A2, N2, M2, 1, 1, T2), dtype=jnp.float32)
    epoch2 = 7

    loss2 = AdaLossPallas(classes=C2, alpha=0.7, label_smoothing_num=0.05,
                          freeze_alpha=2, warm_epoch=4, beta=0.25, begin_action=1)
    out2 = loss2(pred2, target2, flops2, actions2, epoch2, tile_rows=128)
    jax.block_until_ready(out2)
    ref2 = _reference(pred2, target2, flops2, actions2, epoch2,
                      classes=C2, alpha=0.7, smoothing=0.05, freeze_alpha=2,
                      warm_epoch=4, beta=0.25, begin_action=1)
    for got, want in zip(out2, ref2):
        assert jnp.allclose(got, want, atol=1e-4, rtol=1e-4), (got, want)

    print("KERNEL_OK")
</pallas_src>

<mosaic_0001>
module attributes {stable_mosaic.version = 11 : i64} {
  func.func @_ada_loss_kernel(%arg0: i32, %arg1: i32, %arg2: memref<8x16xf32, #tpu.memory_space<vmem>>, %arg3: memref<1x8xi32, #tpu.memory_space<vmem>>, %arg4: memref<4x8x8xf32, #tpu.memory_space<vmem>>, %arg5: memref<1x1x1xf32, #tpu.memory_space<vmem>>, %arg6: memref<1x4x1xf32, #tpu.memory_space<vmem>>, %arg7: memref<1x1xf32, #tpu.memory_space<vmem>>, %arg8: memref<4x1xf32, #tpu.memory_space<vmem>>) attributes {dimension_semantics = [#tpu.dimension_semantics<parallel>, #tpu.dimension_semantics<arbitrary>], iteration_bounds = array<i64: 1, 1>, scalar_prefetch = 0 : i64, scratch_operands = 2 : i64, tpu.core_type = #tpu.core_type<tc>, window_params = [{transform_indices = @transform_0, window_bounds = array<i64: 8, 16>}, {transform_indices = @transform_1, window_bounds = array<i64: 1, 8>}, {transform_indices = @transform_2, window_bounds = array<i64: 4, 8, 8>}, {transform_indices = @transform_3, window_bounds = array<i64: 1, 1, 1>}, {transform_indices = @transform_4, window_bounds = array<i64: 1, 4, 1>}]} {
    %c0_i32 = arith.constant 0 : i32
    %0 = arith.cmpi eq, %arg1, %c0_i32 : i32
    %1 = arith.extui %0 : i1 to i32
    %c0_i32_0 = arith.constant 0 : i32
    %2 = arith.cmpi ne, %1, %c0_i32_0 : i32
    scf.if %2 {
      %cst_25 = arith.constant 0.000000e+00 : f32
      %46 = vector.broadcast %cst_25 : f32 to vector<1x1xf32>
      %c0_26 = arith.constant 0 : index
      %c0_27 = arith.constant 0 : index
      %47 = vector.load %arg7[%c0_26, %c0_27] : memref<1x1xf32, #tpu.memory_space<vmem>>, vector<1x1xf32>
      tpu.vector_store %arg7[%c0_26, %c0_27], %46 {strides = array<i32>} : memref<1x1xf32, #tpu.memory_space<vmem>>, vector<1x1xf32>,
      %cst_28 = arith.constant 0.000000e+00 : f32
      %48 = vector.broadcast %cst_28 : f32 to vector<4x1xf32>
      %c0_29 = arith.constant 0 : index
      %c0_30 = arith.constant 0 : index
      %49 = vector.load %arg8[%c0_29, %c0_30] : memref<4x1xf32, #tpu.memory_space<vmem>>, vector<4x1xf32>
      tpu.vector_store %arg8[%c0_29, %c0_30], %48 {strides = array<i32>} : memref<4x1xf32, #tpu.memory_space<vmem>>, vector<4x1xf32>,
    } else {
    }
    %c0 = arith.constant 0 : index
    %c0_1 = arith.constant 0 : index
    %3 = vector.load %arg2[%c0, %c0_1] : memref<8x16xf32, #tpu.memory_space<vmem>>, vector<8x16xf32>
    %cst = arith.constant dense<0xFF800000> : vector<8xf32>
    %4 = vector.multi_reduction <maximumf>, %3, %cst [1] : vector<8x16xf32> to vector<8xf32>
    %5 = vector.shape_cast %4 : vector<8xf32> to vector<8x1xf32>
    %6 = vector.broadcast %5 : vector<8x1xf32> to vector<8x16xf32>
    %7 = arith.subf %3, %6 : vector<8x16xf32>
    %8 = math.exp %7 : vector<8x16xf32>
    %cst_2 = arith.constant dense<0.000000e+00> : vector<8xf32>
    %9 = vector.multi_reduction <add>, %8, %cst_2 [1] : vector<8x16xf32> to vector<8xf32>
    %10 = vector.shape_cast %9 : vector<8xf32> to vector<8x1xf32>
    %11 = math.log %10 : vector<8x1xf32>
    %12 = tpu.iota {dimensions = array<i32: 1>} : vector<8x16xi32>
    %c0_3 = arith.constant 0 : index
    %c0_4 = arith.constant 0 : index
    %13 = vector.load %arg3[%c0_3, %c0_4] : memref<1x8xi32, #tpu.memory_space<vmem>>, vector<1x8xi32>
    %14 = tpu.transpose %13, [1, 0] : vector<1x8xi32> -> vector<8x1xi32>
    %15 = vector.broadcast %14 : vector<8x1xi32> to vector<8x16xi32>
    %16 = arith.cmpi eq, %12, %15 : vector<8x16xi32>
    %cst_5 = arith.constant 0.899999976 : f32
    %cst_6 = arith.constant 0.00666666683 : f32
    %17 = vector.broadcast %cst_5 : f32 to vector<8x16xf32>
    %18 = vector.broadcast %cst_6 : f32 to vector<8x16xf32>
    %19 = arith.select %16, %17, %18 : vector<8x16xi1>, vector<8x16xf32>
    %20 = arith.mulf %3, %19 : vector<8x16xf32>
    %cst_7 = arith.constant dense<0.000000e+00> : vector<8xf32>
    %21 = vector.multi_reduction <add>, %20, %cst_7 [1] : vector<8x16xf32> to vector<8xf32>
    %22 = vector.shape_cast %21 : vector<8xf32> to vector<8x1xf32>
    %23 = arith.addf %5, %11 : vector<8x1xf32>
    %24 = arith.subf %23, %22 : vector<8x1xf32>
    %c1_i32 = arith.constant 1 : i32
    %25 = arith.muli %arg0, %c1_i32 : i32
    %26 = arith.addi %25, %arg1 : i32
    %c8_i32 = arith.constant 8 : i32
    %27 = arith.muli %26, %c8_i32 : i32
    %c8_i32_8 = arith.constant 8 : i32
    %28 = arith.addi %27, %c8_i32_8 : i32
    %c8_i32_9 = arith.constant 8 : i32
    %29 = arith.cmpi sle, %28, %c8_i32_9 : i32
    %30 = arith.extui %29 : i1 to i32
    %c0_i32_10 = arith.constant 0 : i32
    %31 = arith.cmpi ne, %30, %c0_i32_10 : i32
    scf.if %31 {
      %c0_25 = arith.constant 0 : index
      %c0_26 = arith.constant 0 : index
      %46 = vector.load %arg7[%c0_25, %c0_26] : memref<1x1xf32, #tpu.memory_space<vmem>>, vector<1x1xf32>
      %47 = vector.shape_cast %24 : vector<8x1xf32> to vector<1x8x1xf32>
      %cst_27 = arith.constant dense<0.000000e+00> : vector<1xf32>
      %48 = vector.multi_reduction <add>, %47, %cst_27 [1, 2] : vector<1x8x1xf32> to vector<1xf32>
      %49 = vector.shape_cast %48 : vector<1xf32> to vector<1x1x1xf32>
      %50 = vector.extract %49[0, 0, 0] : f32 from vector<1x1x1xf32>
      %51 = vector.broadcast %50 : f32 to vector<1x1xf32>
      %52 = arith.addf %46, %51 : vector<1x1xf32>
      %c0_28 = arith.constant 0 : index
      %c0_29 = arith.constant 0 : index
      %53 = vector.load %arg7[%c0_28, %c0_29] : memref<1x1xf32, #tpu.memory_space<vmem>>, vector<1x1xf32>
      tpu.vector_store %arg7[%c0_28, %c0_29], %52 {strides = array<i32>} : memref<1x1xf32, #tpu.memory_space<vmem>>, vector<1x1xf32>,
    } else {
    }
    %c8_i32_11 = arith.constant 8 : i32
    %32 = arith.addi %27, %c8_i32_11 : i32
    %c8_i32_12 = arith.constant 8 : i32
    %33 = arith.cmpi sgt, %32, %c8_i32_12 : i32
    %34 = arith.extui %33 : i1 to i32
    %c0_i32_13 = arith.constant 0 : i32
    %35 = arith.cmpi ne, %34, %c0_i32_13 : i32
    scf.if %35 {
      %46 = tpu.iota {dimensions = array<i32: 0>} : vector<8x1xi32>
      %47 = vector.broadcast %27 : i32 to vector<8x1xi32>
      %48 = arith.addi %47, %46 : vector<8x1xi32>
      %c0_25 = arith.constant 0 : index
      %c0_26 = arith.constant 0 : index
      %49 = vector.load %arg7[%c0_25, %c0_26] : memref<1x1xf32, #tpu.memory_space<vmem>>, vector<1x1xf32>
      %c8_i32_27 = arith.constant 8 : i32
      %50 = vector.broadcast %c8_i32_27 : i32 to vector<8x1xi32>
      %51 = arith.cmpi slt, %48, %50 : vector<8x1xi32>
      %cst_28 = arith.constant 0.000000e+00 : f32
      %52 = vector.broadcast %cst_28 : f32 to vector<8x1xf32>
      %53 = arith.select %51, %24, %52 : vector<8x1xi1>, vector<8x1xf32>
      %54 = vector.shape_cast %53 : vector<8x1xf32> to vector<1x8x1xf32>
      %cst_29 = arith.constant dense<0.000000e+00> : vector<1xf32>
      %55 = vector.multi_reduction <add>, %54, %cst_29 [1, 2] : vector<1x8x1xf32> to vector<1xf32>
      %56 = vector.shape_cast %55 : vector<1xf32> to vector<1x1x1xf32>
      %57 = vector.extract %56[0, 0, 0] : f32 from vector<1x1x1xf32>
      %58 = vector.broadcast %57 : f32 to vector<1x1xf32>
      %59 = arith.addf %49, %58 : vector<1x1xf32>
      %c0_30 = arith.constant 0 : index
      %c0_31 = arith.constant 0 : index
      %60 = vector.load %arg7[%c0_30, %c0_31] : memref<1x1xf32, #tpu.memory_space<vmem>>, vector<1x1xf32>
      tpu.vector_store %arg7[%c0_30, %c0_31], %59 {strides = array<i32>} : memref<1x1xf32, #tpu.memory_space<vmem>>, vector<1x1xf32>,
    } else {
    }
    %c0_14 = arith.constant 0 : index
    %c0_15 = arith.constant 0 : index
    %c0_16 = arith.constant 0 : index
    %36 = vector.load %arg4[%c0_14, %c0_15, %c0_16] : memref<4x8x8xf32, #tpu.memory_space<vmem>>, vector<4x8x8xf32>
    %cst_17 = arith.constant dense<0.000000e+00> : vector<4x8xf32>
    %37 = vector.multi_reduction <add>, %36, %cst_17 [1] : vector<4x8x8xf32> to vector<4x8xf32>
    %c0_18 = arith.constant 0 : index
    %c0_19 = arith.constant 0 : index
    %38 = vector.load %arg8[%c0_18, %c0_19] : memref<4x1xf32, #tpu.memory_space<vmem>>, vector<4x1xf32>
    %cst_20 = arith.constant dense<0.000000e+00> : vector<4xf32>
    %39 = vector.multi_reduction <add>, %37, %cst_20 [1] : vector<4x8xf32> to vector<4xf32>
    %40 = vector.shape_cast %39 : vector<4xf32> to vector<4x1xf32>
    %41 = arith.addf %38, %40 : vector<4x1xf32>
    %c0_21 = arith.constant 0 : index
    %c0_22 = arith.constant 0 : index
    %42 = vector.load %arg8[%c0_21, %c0_22] : memref<4x1xf32, #tpu.memory_space<vmem>>, vector<4x1xf32>
    tpu.vector_store %arg8[%c0_21, %c0_22], %41 {strides = array<i32>} : memref<4x1xf32, #tpu.memory_space<vmem>>, vector<4x1xf32>,
    %c0_i32_23 = arith.constant 0 : i32
    %43 = arith.cmpi eq, %arg1, %c0_i32_23 : i32
    %44 = arith.extui %43 : i1 to i32
    %c0_i32_24 = arith.constant 0 : i32
    %45 = arith.cmpi ne, %44, %c0_i32_24 : i32
    scf.if %45 {
      %c0_25 = arith.constant 0 : index
      %c0_26 = arith.constant 0 : index
      %46 = vector.load %arg7[%c0_25, %c0_26] : memref<1x1xf32, #tpu.memory_space<vmem>>, vector<1x1xf32>
      %c0_27 = arith.constant 0 : index
      %c0_28 = arith.constant 0 : index
      %c0_29 = arith.constant 0 : index
      %47 = vector.load %arg5[%c0_27, %c0_28, %c0_29] : memref<1x1x1xf32, #tpu.memory_space<vmem>>, vector<1x1x1xf32>
      %48 = vector.shape_cast %47 : vector<1x1x1xf32> to vector<1x1xf32>
      %49 = vector.shape_cast %46 : vector<1x1xf32> to vector<1x1x1xf32>
      tpu.vector_store %arg5[%c0_27, %c0_28, %c0_29], %49 {strides = array<i32>} : memref<1x1x1xf32, #tpu.memory_space<vmem>>, vector<1x1x1xf32>,
      %c0_30 = arith.constant 0 : index
      %c0_31 = arith.constant 0 : index
      %50 = vector.load %arg8[%c0_30, %c0_31] : memref<4x1xf32, #tpu.memory_space<vmem>>, vector<4x1xf32>
      %c0_32 = arith.constant 0 : index
      %c0_33 = arith.constant 0 : index
      %c0_34 = arith.constant 0 : index
      %51 = vector.load %arg6[%c0_32, %c0_33, %c0_34] : memref<1x4x1xf32, #tpu.memory_space<vmem>>, vector<1x4x1xf32>
      %52 = vector.shape_cast %51 : vector<1x4x1xf32> to vector<4x1xf32>
      %53 = vector.shape_cast %50 : vector<4x1xf32> to vector<1x4x1xf32>
      tpu.vector_store %arg6[%c0_32, %c0_33, %c0_34], %53 {strides = array<i32>} : memref<1x4x1xf32, #tpu.memory_space<vmem>>, vector<1x4x1xf32>,
    } else {
    }
    return
  }
  func.func @transform_0(%arg0: i32, %arg1: i32) -> (i32, i32) {
    %c1_i32 = arith.constant 1 : i32
    %0 = arith.muli %arg0, %c1_i32 : i32
    %1 = arith.addi %0, %arg1 : i32
    %c0_i32 = arith.constant 0 : i32
    %c0_i32_0 = arith.constant 0 : i32
    return %1, %c0_i32 : i32, i32
  }
  func.func @transform_1(%arg0: i32, %arg1: i32) -> (i32, i32) {
    %c1_i32 = arith.constant 1 : i32
    %0 = arith.muli %arg0, %c1_i32 : i32
    %1 = arith.addi %0, %arg1 : i32
    %c0_i32 = arith.constant 0 : i32
    %c0_i32_0 = arith.constant 0 : i32
    return %c0_i32, %1 : i32, i32
  }
  func.func @transform_2(%arg0: i32, %arg1: i32) -> (i32, i32, i32) {
    %c1_i32 = arith.constant 1 : i32
    %0 = arith.muli %arg0, %c1_i32 : i32
    %1 = arith.addi %0, %arg1 : i32
    %c0_i32 = arith.constant 0 : i32
    %c0_i32_0 = arith.constant 0 : i32
    %c0_i32_1 = arith.constant 0 : i32
    return %c0_i32, %c0_i32_0, %1 : i32, i32, i32
  }
  func.func @transform_3(%arg0: i32, %arg1: i32) -> (i32, i32, i32) {
    %c0_i32 = arith.constant 0 : i32
    %c0_i32_0 = arith.constant 0 : i32
    %c0_i32_1 = arith.constant 0 : i32
    return %arg0, %c0_i32, %c0_i32_0 : i32, i32, i32
  }
  func.func @transform_4(%arg0: i32, %arg1: i32) -> (i32, i32, i32) {
    %c0_i32 = arith.constant 0 : i32
    %c0_i32_0 = arith.constant 0 : i32
    %c0_i32_1 = arith.constant 0 : i32
    return %arg0, %c0_i32, %c0_i32_0 : i32, i32, i32
  }
}

</mosaic_0001>

<llo_original>
// kernel: tpu_custom_call.1
$region0: #{tpu_custom_call.1}
  #allocation0 [shape = 'u32[]', space=smem, size = 0x4, offset = 0x4, fixed_abs, tag = 'smem constant byte address 0x4 - core index']
  #allocation1 [shape = 'u32[144,128]{1,0:T(1,128)}', space=vmem, size = 0x12000, scoped, tag = 'internal scratch']
  #allocation2 [shape = 'f32[1,1]{1,0:T(1,128)}', space=vmem, size = 0x200, scoped, tag = 'scratch operand']
  #allocation3 [shape = 'f32[4,1]{1,0:T(4,128)}', space=vmem, size = 0x800, scoped, tag = 'scratch operand']
  %s0 = inlined_call_operand.hbm [shape: f32[8,16], index: 0, kind: input, shape index: {}]
  %s1 = inlined_call_operand.vmem [shape: s32[1,8], index: 1, kind: input, shape index: {}]
  %s2 = inlined_call_operand.hbm [shape: f32[4,8,8], index: 2, kind: input, shape index: {}]
  %s3 = inlined_call_operand.hbm [shape: f32[1,1,1], index: 3, kind: output, shape index: {0}]
  %s4 = inlined_call_operand.vmem [shape: f32[1,4,1], index: 4, kind: output, shape index: {1}]
  %5 = xla_tuple %s3, %s4
  %s6 = sld [smem:[#allocation0]]
  $region54: #{tpu_custom_call.1} parent=0
    _
  %s8 = ssub.s32 1, %s6
  %s9 = scalar_select 0, %s8, %s6
  $region1: #{tpu_custom_call.1} parent=0
    #allocation4 [shape = 'u8[4096]{0}', space=vmem, size = 0x1000, scoped, tag = 'input window, operand 0, single buffered']
    #allocation5 [shape = 's32[1]{0}', space=sflag, size = 0x4, scoped, tag = 'scoped memory for tpu_custom_call.1']
    #allocation6 [shape = 's32[1]{0}', space=sflag, size = 0x4, scoped, tag = 'scoped memory for tpu_custom_call.1']
    #allocation7 [shape = 'u8[16384]{0}', space=vmem, size = 0x4000, scoped, tag = 'input window, operand 2, single buffered']
    #allocation8 [shape = 's32[1]{0}', space=sflag, size = 0x4, scoped, tag = 'scoped memory for tpu_custom_call.1']
    #allocation9 [shape = 'u8[512]{0}', space=vmem, size = 0x400, scoped, tag = 'output window, operand 0, single buffered']
    %10 = vsyncpa [#allocation5], 0
    %11 = vsyncpa [#allocation8], 0
    %12 = vsyncpa [#allocation6], 0
    // Predicated region
    $region2: #{tpu_custom_call.1} parent=1 // pred_check
      _
    $region3: #{tpu_custom_call.1} parent=1 // pred_check_branch
      %14 = sbr.rel (0) target = $region5
    $region4: #{tpu_custom_call.1} parent=1 // pred_region
      %s15 = sadd.s32 0, 0
      %s17 = ssub.s32 128, 128
      %18 = vsyncadd [#allocation5], %s17
      %s19 = smul.addr %s15, 128
      %s20 = scalar_lea.hbm %s0, %s19
      %s22 = sshll.u32 [#allocation4], 4
      %s23 = int_to_ptr.vmem [resolvable:$true] %s22
      %25 = dma.hbm_to_vmem [thread:$0]  %s20, 128, %s23, [#allocation5]
    $region5: #{tpu_custom_call.1} parent=1 // pred_fallthru
      _
    // Predicated region
    $region6: #{tpu_custom_call.1} parent=1 // pred_check
      _
    $region7: #{tpu_custom_call.1} parent=1 // pred_check_branch
      %27 = sbr.rel (0) target = $region9
    $region8: #{tpu_custom_call.1} parent=1 // pred_region
      %s28 = sadd.s32 0, 0
      %p29 = scmp.lt.s32.totalorder %s28, 0
      %s30 = scalar_select %p29, %s28, 0
      %s31 = scalar_lea.vmem %s1, %s30
      %s32 = sadd.s32 0, 0
    $region9: #{tpu_custom_call.1} parent=1 // pred_fallthru
      _
    // Predicated region
    $region10: #{tpu_custom_call.1} parent=1 // pred_check
      _
    $region11: #{tpu_custom_call.1} parent=1 // pred_check_branch
      %34 = sbr.rel (0) target = $region13
    $region12: #{tpu_custom_call.1} parent=1 // pred_region
      %s35 = sadd.s32 0, 0
      %s37 = ssub.s32 512, 512
      %38 = vsyncadd [#allocation8], %s37
      %s39 = smul.addr %s35, 128
      %s40 = scalar_lea.hbm %s2, %s39
      %s41 = sshll.u32 [#allocation7], 4
      %s42 = int_to_ptr.vmem [resolvable:$true] %s41
      %47 = dma.hbm_to_vmem [thread:$0]  %s40, 512, %s42, [#allocation8], 128, 128, 8
    $region13: #{tpu_custom_call.1} parent=1 // pred_fallthru
      _
    // Predicated region
    $region14: #{tpu_custom_call.1} parent=1 // pred_check
      _
    $region15: #{tpu_custom_call.1} parent=1 // pred_check_branch
      %49 = sbr.rel (0) target = $region17
    $region16: #{tpu_custom_call.1} parent=1 // pred_region
      %50 = dma.done [#allocation5], 128
    $region17: #{tpu_custom_call.1} parent=1 // pred_fallthru
      _
    // Predicated region
    $region18: #{tpu_custom_call.1} parent=1 // pred_check
      _
    $region19: #{tpu_custom_call.1} parent=1 // pred_check_branch
      %52 = sbr.rel (0) target = $region21
    $region20: #{tpu_custom_call.1} parent=1 // pred_region
      %53 = dma.done [#allocation8], 512
    $region21: #{tpu_custom_call.1} parent=1 // pred_fallthru
      _
    %s54 = sadd.s32 0, 0
    %p55 = scmp.lt.s32.totalorder %s54, 0
    %s56 = scalar_select %p55, %s54, 0
    %s57 = scalar_lea.vmem %s1, %s56
    %s58 = sadd.s32 0, 0
    %s59 = sadd.s32 0, 0
    %p60 = scmp.lt.s32.totalorder %s59, 0
    %s61 = scalar_select %p60, %s59, 0
    %s62 = scalar_lea.vmem %s1, %s61
    %s63 = sadd.s32 0, 0
    %s64 = sadd.s32 0, 0
    %p65 = scmp.eq.s32.totalorder 0, 0
    // Predicated region
    $region22: #{tpu_custom_call.1} parent=1 // pred_check
      %p66 = pneg %p65
    $region23: #{tpu_custom_call.1} parent=1 // pred_check_branch
      %68 = sbr.rel (%p66) target = $region25
    $region24: #{tpu_custom_call.1} parent=1 // pred_region
      %vm69 = vcmask 0
      %70 = vst.msk [vmem:[#allocation2] sm:$0x1] %vm69, 0.0
      %vm71 = vcmask 3072
      %72 = vst.msk [vmem:[#allocation3] sm:$0xf] %vm71, 0.0
    $region25: #{tpu_custom_call.1} parent=1 // pred_fallthru
      _
    %v73 = vld [vmem:[#allocation4] sm:$0xff]
    %vm74 = vcmask 130048
    %v75 = vsel %vm74, %v73, -inf
    %76 = vmax.xlane.f32.xlu0 %v75
    %v77 = vpop.xlane.xlu0 %76
    %v78 = vsub.f32 %v73, %v77
    %v79 = vmul.f32 %v78, 1.442695
    %v80 = vpow.pop %v79
    %v81 = vsel %vm74, %v80, 0.0
    %82 = vadd.xlane.f32.xlu0 %v81
    %v83 = vpop.xlane.xlu0 %82
    %v84 = vlog2.pop %v83
    %v85 = vmul.f32 %v84, 0.6931472
    %v86 = vlaneseq
    %v87 = vand.u32 %v86, 127
    %v88 = vld [vmem:[%s62] sm:$0x1]
    %89 = vxpose.xlu0.b32.start [1/16] %v88, 128
    %90 = vxpose.xlu0.b32.cont [2/16] 0, 128
    %91 = vxpose.xlu0.b32.cont [3/16] 0, 128
    %92 = vxpose.xlu0.b32.cont [4/16] 0, 128
    %93 = vxpose.xlu0.b32.cont [5/16] 0, 128
    %94 = vxpose.xlu0.b32.cont [6/16] 0, 128
    %95 = vxpose.xlu0.b32.cont [7/16] 0, 128
    %96 = vxpose.xlu0.b32.cont [8/16] 0, 128
    %97 = vxpose.xlu0.b32.cont [9/16] 0, 128
    %98 = vxpose.xlu0.b32.cont [10/16] 0, 128
    %99 = vxpose.xlu0.b32.cont [11/16] 0, 128
    %100 = vxpose.xlu0.b32.cont [12/16] 0, 128
    %101 = vxpose.xlu0.b32.cont [13/16] 0, 128
    %102 = vxpose.xlu0.b32.cont [14/16] 0, 128
    %103 = vxpose.xlu0.b32.cont [15/16] 0, 128
    %104 = vxpose.xlu0.b32.end [16/16] 0, 128
    %v105 = vpop.trf.xlu0
    %v106 = vpop.trf.xlu0
    %v107 = vpop.trf.xlu0
    %v108 = vpop.trf.xlu0
    %v109 = vpop.trf.xlu0
    %v110 = vpop.trf.xlu0
    %v111 = vpop.trf.xlu0
    %v112 = vpop.trf.xlu0
    %v113 = vpop.trf.xlu0
    %v114 = vpop.trf.xlu0
    %v115 = vpop.trf.xlu0
    %v116 = vpop.trf.xlu0
    %v117 = vpop.trf.xlu0
    %v118 = vpop.trf.xlu0
    %v119 = vpop.trf.xlu0
    %v120 = vpop.trf.xlu0
    %121 = vset.pattern.permute.xlu0 0
    %122 = vperm.xlu0 %121, %v105
    %v123 = vpop.permute.xlu0 %122
    %vm124 = vcmp.eq.s32.totalorder %v87, %v123
    %v125 = vsel %vm124, 0.9, 0.006666667
    %v126 = vmul.f32 %v73, %v125
    %v127 = vsel %vm74, %v126, 0.0
    %128 = vadd.xlane.f32.xlu0 %v127
    %v129 = vpop.xlane.xlu0 %128
    %v130 = vadd.f32 %v77, %v85
    %v131 = vsub.f32 %v130, %v129
    %s132 = sadd.s32 0, 0
    %s133 = smul.u32 %s132, 8
    %s134 = sadd.s32 %s133, 8
    %p135 = scmp.le.s32.totalorder %s134, 8
    // Predicated region
    $region26: #{tpu_custom_call.1} parent=1 // pred_check
      %p136 = pneg %p135
    $region27: #{tpu_custom_call.1} parent=1 // pred_check_branch
      %138 = sbr.rel (%p136) target = $region29
    $region28: #{tpu_custom_call.1} parent=1 // pred_region
      %v139 = vld [vmem:[#allocation2] sm:$0x1]
      %vm140 = vcmask 7168
      %v141 = vsel %vm140, %v131, 0.0
      %142 = vadd.xlane.f32.xlu0 %v141
      %v143 = vpop.xlane.xlu0 %142
      %v144 = vrot.slane %v143, 4
      %v145 = vadd.f32 %v143, %v144
      %v146 = vrot.slane %v145, 2
      %v147 = vadd.f32 %v145, %v146
      %v148 = vrot.slane %v147, 1
      %v149 = vadd.f32 %v147, %v148
      %s150 = vtos %v149
      %v151 = vstv %s150
      %v152 = vadd.f32 %v139, %v151
      %vm153 = vcmask 0
      %154 = vst.msk [vmem:[#allocation2] sm:$0x1] %vm153, %v152
    $region29: #{tpu_custom_call.1} parent=1 // pred_fallthru
      _
    %p155 = scmp.gt.s32.totalorder %s134, 8
    // Predicated region
    $region30: #{tpu_custom_call.1} parent=1 // pred_check
      %p156 = pneg %p155
    $region31: #{tpu_custom_call.1} parent=1 // pred_check_branch
      %158 = sbr.rel (%p156) target = $region33
    $region32: #{tpu_custom_call.1} parent=1 // pred_region
      %v159 = vlaneseq
      %v160 = vshrl.u32 %v159, 7
      %v161 = vstv %s133
      %v162 = vadd.s32 %v161, %v160
      %v163 = vld [vmem:[#allocation2] sm:$0x1]
      %vm164 = vcmp.lt.s32.totalorder %v162, 8
      %v165 = vsel %vm164, %v131, 0.0
      %vm166 = vcmask 7168
      %v167 = vsel %vm166, %v165, 0.0
      %168 = vadd.xlane.f32.xlu0 %v167
      %v169 = vpop.xlane.xlu0 %168
      %v170 = vrot.slane %v169, 4
      %v171 = vadd.f32 %v169, %v170
      %v172 = vrot.slane %v171, 2
      %v173 = vadd.f32 %v171, %v172
      %v174 = vrot.slane %v173, 1
      %v175 = vadd.f32 %v173, %v174
      %s176 = vtos %v175
      %v177 = vstv %s176
      %v178 = vadd.f32 %v163, %v177
      %vm179 = vcmask 0
      %180 = vst.msk [vmem:[#allocation2] sm:$0x1] %vm179, %v178
    $region33: #{tpu_custom_call.1} parent=1 // pred_fallthru
      _
    %v181 = vld [vmem:[#allocation7] sm:$0xff]
    %v182 = vld [vmem:[#allocation7 + $0x8] sm:$0xff]
    %v183 = vld [vmem:[#allocation7 + $0x10] sm:$0xff]
    %v184 = vld [vmem:[#allocation7 + $0x18] sm:$0xff]
    %vm185 = vcmask 64512
    %v186 = vsel %vm185, %v181, 0.0
    %v187 = vrot.slane %v186, 4
    %v188 = vadd.f32 %v186, %v187
    %v189 = vrot.slane %v188, 2
    %v190 = vadd.f32 %v188, %v189
    %v191 = vrot.slane %v190, 1
    %v192 = vadd.f32 %v190, %v191
    %v193 = vsel %vm185, %v182, 0.0
    %v194 = vrot.slane %v193, 4
    %v195 = vadd.f32 %v193, %v194
    %v196 = vrot.slane %v195, 2
    %v197 = vadd.f32 %v195, %v196
    %v198 = vrot.slane %v197, 1
    %v199 = vadd.f32 %v197, %v198
    %v200 = vsel %vm185, %v183, 0.0
    %v201 = vrot.slane %v200, 4
    %v202 = vadd.f32 %v200, %v201
    %v203 = vrot.slane %v202, 2
    %v204 = vadd.f32 %v202, %v203
    %v205 = vrot.slane %v204, 1
    %v206 = vadd.f32 %v204, %v205
    %v207 = vsel %vm185, %v184, 0.0
    %v208 = vrot.slane %v207, 4
    %v209 = vadd.f32 %v207, %v208
    %v210 = vrot.slane %v209, 2
    %v211 = vadd.f32 %v209, %v210
    %v212 = vrot.slane %v211, 1
    %v213 = vadd.f32 %v211, %v212
    %v214 = vld [vmem:[#allocation3] sm:$0xf]
    %vm219 = vcmask 1041409
    %v220 = vsel %vm219, %v199, %v192
    %vm221 = vcmask 1042434
    %v222 = vsel %vm221, %v206, %v220
    %vm223 = vcmask 1043459
    %v224 = vsel %vm223, %v213, %v222
    %vm226 = vcmask 60416
    %v227 = vsel %vm226, %v224, 0.0
    %228 = vadd.xlane.f32.xlu0 %v227
    %v229 = vpop.xlane.xlu0 %228
    %v230 = vadd.f32 %v214, %v229
    %vm231 = vcmask 3072
    %232 = vst.msk [vmem:[#allocation3] sm:$0xf] %vm231, %v230
    // Predicated region
    $region34: #{tpu_custom_call.1} parent=1 // pred_check
      %p233 = pneg %p65
    $region35: #{tpu_custom_call.1} parent=1 // pred_check_branch
      %235 = sbr.rel (%p233) target = $region37
    $region36: #{tpu_custom_call.1} parent=1 // pred_region
      %v236 = vld [vmem:[#allocation2] sm:$0x1]
      %vm237 = vcmask 0
      %238 = vst.msk [vmem:[#allocation9] sm:$0x1] %vm237, %v236
      %v239 = vld [vmem:[#allocation3] sm:$0xf]
      %240 = vst.msk [vmem:[%s4] sm:$0xf] %vm231, %v239
    $region37: #{tpu_custom_call.1} parent=1 // pred_fallthru
      _
    // Predicated region
    $region38: #{tpu_custom_call.1} parent=1 // pred_check
      _
    $region39: #{tpu_custom_call.1} parent=1 // pred_check_branch
      %242 = sbr.rel (0) target = $region41
    $region40: #{tpu_custom_call.1} parent=1 // pred_region
      %s244 = ssub.s32 16, 16
      %245 = vsyncadd [#allocation6], %s244
      %s247 = sshll.u32 [#allocation9], 4
      %s248 = int_to_ptr.vmem [resolvable:$true] %s247
      %250 = dma.vmem_to_hbm [thread:$0]  %s248, 16, %s3, [#allocation6]
    $region41: #{tpu_custom_call.1} parent=1 // pred_fallthru
      _
    // Predicated region
    $region42: #{tpu_custom_call.1} parent=1 // pred_check
      _
    $region43: #{tpu_custom_call.1} parent=1 // pred_check_branch
      %252 = sbr.rel (0) target = $region45
    $region44: #{tpu_custom_call.1} parent=1 // pred_region
      _
    $region45: #{tpu_custom_call.1} parent=1 // pred_fallthru
      _
    // Predicated region
    $region46: #{tpu_custom_call.1} parent=1 // pred_check
      _
    $region47: #{tpu_custom_call.1} parent=1 // pred_check_branch
      %254 = sbr.rel (0) target = $region49
    $region48: #{tpu_custom_call.1} parent=1 // pred_region
      %255 = dma.done [#allocation6], 16
    $region49: #{tpu_custom_call.1} parent=1 // pred_fallthru
      _
    // Predicated region
    $region50: #{tpu_custom_call.1} parent=1 // pred_check
      _
    $region51: #{tpu_custom_call.1} parent=1 // pred_check_branch
      %257 = sbr.rel (0) target = $region53
    $region52: #{tpu_custom_call.1} parent=1 // pred_region
      _
    $region53: #{tpu_custom_call.1} parent=1 // pred_fallthru
      _
    %258 = vsyncpa [#allocation5], 1
    %259 = vsyncpa [#allocation8], 1
    %260 = vsyncpa [#allocation6], 1

</llo_original>
